<compile_context>
chip_gen: v5e
topology: v5e:2x2
jax: 0.10.0
libtpu: 0.0.40
codegen_flags: <defaults>
</compile_context>

<pallas_src>
import numpy as np
import jax
import jax.numpy as jnp
from jax.experimental import pallas as pl
from jax.experimental.pallas import tpu as pltpu

# ----------------------------- configuration --------------------------------
DIM = 2            # sample dimension (double-well example)
HID = 32           # MADE hidden width
N_MAF_LAYERS = 4   # number of MAF layers
BATCH = 256        # example batch (2 grid steps of 128 lanes)
TB = 128           # batch tile = one full lane width


# ------------------------------ MADE masks ----------------------------------
def made_masks(dim, hid, reversed_order):
    """Autoregressive masks, oriented (in_features, out_features)."""
    in_deg = np.arange(1, dim + 1)
    if reversed_order:
        in_deg = in_deg[::-1].copy()
    hid_deg = (np.arange(hid) % max(dim - 1, 1)) + 1
    out_deg = np.tile(in_deg, 2)  # [shift degrees | log_scale degrees]

    m1 = (hid_deg[None, :] >= in_deg[:, None]).astype(np.float32)   # (dim, hid)
    m2 = (hid_deg[None, :] >= hid_deg[:, None]).astype(np.float32)  # (hid, hid)
    m3 = (out_deg[None, :] > hid_deg[:, None]).astype(np.float32)   # (hid, 2*dim)
    return m1, m2, m3


def init_params(key):
    """Deterministic parameter init, masks already applied to the weights."""
    w1s, b1s, w2s, b2s, w3s, b3s = [], [], [], [], [], []
    for layer in range(N_MAF_LAYERS):
        rev = (layer % 2 == 1)           # degrees_in = 'input' / 'reversed'
        m1, m2, m3 = made_masks(DIM, HID, rev)
        key, k1, k2, k3, k4, k5, k6 = jax.random.split(key, 7)
        w1s.append(jax.random.normal(k1, (DIM, HID), jnp.float32) * 0.2 * m1)
        w2s.append(jax.random.normal(k2, (HID, HID), jnp.float32) * 0.2 * m2)
        w3s.append(jax.random.normal(k3, (HID, 2 * DIM), jnp.float32) * 0.2 * m3)
        b1s.append(jax.random.normal(k4, (1, HID), jnp.float32) * 0.1)
        b2s.append(jax.random.normal(k5, (1, HID), jnp.float32) * 0.1)
        b3s.append(jax.random.normal(k6, (1, 2 * DIM), jnp.float32) * 0.1)
    stack = lambda xs: jnp.stack(xs, axis=0)
    return (stack(w1s), stack(b1s), stack(w2s), stack(b2s), stack(w3s), stack(b3s))


# ------------------------------ Pallas kernel --------------------------------
def toyflow_kernel(xt_ref, w1_ref, b1_ref, w2_ref, b2_ref, w3_ref, b3_ref,
                   out_ref):
    """Transposed (feature, batch) layout: batch is on the lane axis."""
    x = xt_ref[...]                                        # (DIM, TB) f32
    log_det = jnp.zeros((1, x.shape[1]), jnp.float32)      # (1, TB)

    for l in range(N_MAF_LAYERS):                          # static unroll (4)
        # --- MADE layer 1: K=DIM(=2) contraction on the VPU -----------------
        w1 = w1_ref[l]                                     # (HID, DIM)
        pre1 = w1[:, 0:1] * x[0:1, :]                      # broadcast mul
        for d in range(1, DIM):
            pre1 = pre1 + w1[:, d:d + 1] * x[d:d + 1, :]
        h1 = jnp.tanh(pre1 + b1_ref[l])                    # (HID, TB)

        # --- MADE layer 2: K=HID contraction on the MXU (lane-dense RHS) ----
        h2 = jnp.tanh(
            jnp.dot(w2_ref[l], h1, preferred_element_type=jnp.float32)
            + b2_ref[l])                                   # (HID, TB)

        # --- output layer: (2*DIM, HID) @ (HID, TB) --------------------------
        out = (jnp.dot(w3_ref[l], h2, preferred_element_type=jnp.float32)
               + b3_ref[l])                                # (2*DIM, TB)
        shift = out[:DIM, :]
        log_scale = out[DIM:, :]

        # affine transformer + log-det accumulation (VPU sublane adds, no XLU)
        x = x * jnp.exp(log_scale) + shift
        for d in range(DIM):
            log_det = log_det + log_scale[d:d + 1, :]

    # single merged, lane-dense output slab: rows [y ; log_det]
    out_ref[:DIM, :] = x
    out_ref[DIM:DIM + 1, :] = log_det


def toyflow_forward(x, params, tb=TB):
    w1, b1, w2, b2, w3, b3 = params
    B = x.shape[0]
    B_pad = ((B + tb - 1) // tb) * tb

    # Lane-dense layout: batch on the lane axis, zero-padded to a multiple of tb.
    xt = jnp.zeros((DIM, B_pad), jnp.float32).at[:, :B].set(x.T)

    # Pre-transpose weights/biases to (out_features, in_features) so the kernel
    # works directly on (feature, batch) tiles.  Pure layout plumbing.
    w1t = jnp.transpose(w1, (0, 2, 1))     # (L, HID, DIM)
    b1t = jnp.transpose(b1, (0, 2, 1))     # (L, HID, 1)
    w2t = jnp.transpose(w2, (0, 2, 1))     # (L, HID, HID)
    b2t = jnp.transpose(b2, (0, 2, 1))     # (L, HID, 1)
    w3t = jnp.transpose(w3, (0, 2, 1))     # (L, 2*DIM, HID)
    b3t = jnp.transpose(b3, (0, 2, 1))     # (L, 2*DIM, 1)

    def resident(a):  # whole-array block, same block every grid step (stays in VMEM)
        return pl.BlockSpec(a.shape, lambda i: (0,) * a.ndim)

    out = pl.pallas_call(
        toyflow_kernel,
        grid=(B_pad // tb,),
        out_shape=jax.ShapeDtypeStruct((DIM + 1, B_pad), jnp.float32),
        in_specs=[
            pl.BlockSpec((DIM, tb), lambda i: (0, i)),      # x tile, batch on lanes
            resident(w1t), resident(b1t),
            resident(w2t), resident(b2t),
            resident(w3t), resident(b3t),
        ],
        out_specs=pl.BlockSpec((DIM + 1, tb), lambda i: (0, i)),
        compiler_params=pltpu.CompilerParams(
            dimension_semantics=("parallel",)),             # shard batch over TCs
    )(xt, w1t, b1t, w2t, b2t, w3t, b3t)

    y = out[:DIM, :B].T                                     # (B, DIM)
    log_det = out[DIM, :B][:, None]                         # (B, 1)
    return y, log_det


# ------------------------------ JAX reference --------------------------------
def toyflow_reference(x, params):
    w1, b1, w2, b2, w3, b3 = params
    log_det = jnp.zeros((x.shape[0], 1), jnp.float32)
    for l in range(N_MAF_LAYERS):
        pre1 = x[:, 0:1] * w1[l, 0:1, :]
        for d in range(1, DIM):
            pre1 = pre1 + x[:, d:d + 1] * w1[l, d:d + 1, :]
        h1 = jnp.tanh(pre1 + b1[l])
        h2 = jnp.tanh(h1 @ w2[l] + b2[l])
        out = h2 @ w3[l] + b3[l]
        shift, log_scale = out[:, :DIM], out[:, DIM:]
        x = x * jnp.exp(log_scale) + shift
        log_det = log_det + jnp.sum(log_scale, axis=-1, keepdims=True)
    return x, log_det


# ---------------------------------- main -------------------------------------
if __name__ == "__main__":
    key = jax.random.PRNGKey(0)
    key, kx = jax.random.split(key)
    x = jax.random.normal(kx, (BATCH, DIM), jnp.float32)
    params = init_params(key)

    y, log_det = toyflow_forward(x, params)
    jax.block_until_ready((y, log_det))

    y_ref, ld_ref = toyflow_reference(x, params)
    np.testing.assert_allclose(np.asarray(y), np.asarray(y_ref),
                               rtol=1e-4, atol=1e-4)
    np.testing.assert_allclose(np.asarray(log_det), np.asarray(ld_ref),
                               rtol=1e-4, atol=1e-4)

    print("KERNEL_OK")
</pallas_src>

<mosaic_0001>
module attributes {stable_mosaic.version = 11 : i64} {
  func.func @toyflow_kernel(%arg0: i32, %arg1: memref<2x128xf32, #tpu.memory_space<vmem>>, %arg2: memref<4x32x2xf32, #tpu.memory_space<vmem>>, %arg3: memref<4x32x1xf32, #tpu.memory_space<vmem>>, %arg4: memref<4x32x32xf32, #tpu.memory_space<vmem>>, %arg5: memref<4x32x1xf32, #tpu.memory_space<vmem>>, %arg6: memref<4x4x32xf32, #tpu.memory_space<vmem>>, %arg7: memref<4x4x1xf32, #tpu.memory_space<vmem>>, %arg8: memref<3x128xf32, #tpu.memory_space<vmem>>) attributes {dimension_semantics = [#tpu.dimension_semantics<parallel>], iteration_bounds = array<i64: 2>, scalar_prefetch = 0 : i64, scratch_operands = 0 : i64, tpu.core_type = #tpu.core_type<tc>, window_params = [{transform_indices = @transform_0, window_bounds = array<i64: 2, 128>}, {pipeline_mode = #tpu.pipeline_mode<synchronous>, transform_indices = @transform_1, window_bounds = array<i64: 4, 32, 2>}, {pipeline_mode = #tpu.pipeline_mode<synchronous>, transform_indices = @transform_2, window_bounds = array<i64: 4, 32, 1>}, {pipeline_mode = #tpu.pipeline_mode<synchronous>, transform_indices = @transform_3, window_bounds = array<i64: 4, 32, 32>}, {pipeline_mode = #tpu.pipeline_mode<synchronous>, transform_indices = @transform_4, window_bounds = array<i64: 4, 32, 1>}, {pipeline_mode = #tpu.pipeline_mode<synchronous>, transform_indices = @transform_5, window_bounds = array<i64: 4, 4, 32>}, {pipeline_mode = #tpu.pipeline_mode<synchronous>, transform_indices = @transform_6, window_bounds = array<i64: 4, 4, 1>}, {transform_indices = @transform_7, window_bounds = array<i64: 3, 128>}]} {
    %c0 = arith.constant 0 : index
    %c0_0 = arith.constant 0 : index
    %0 = vector.load %arg1[%c0, %c0_0] : memref<2x128xf32, #tpu.memory_space<vmem>>, vector<2x128xf32>
    %cst = arith.constant 0.000000e+00 : f32
    %1 = vector.broadcast %cst : f32 to vector<1x128xf32>
    %c0_1 = arith.constant 0 : index
    %c0_2 = arith.constant 0 : index
    %c0_3 = arith.constant 0 : index
    %2 = vector.load %arg2[%c0_1, %c0_2, %c0_3] : memref<4x32x2xf32, #tpu.memory_space<vmem>>, vector<1x32x2xf32>
    %3 = vector.shape_cast %2 : vector<1x32x2xf32> to vector<32x2xf32>
    %4 = vector.extract_strided_slice %3 {offsets = [0, 0], sizes = [32, 1], strides = [1, 1]} : vector<32x2xf32> to vector<32x1xf32>
    %5 = vector.extract_strided_slice %0 {offsets = [0, 0], sizes = [1, 128], strides = [1, 1]} : vector<2x128xf32> to vector<1x128xf32>
    %6 = vector.broadcast %4 : vector<32x1xf32> to vector<32x128xf32>
    %7 = vector.broadcast %5 : vector<1x128xf32> to vector<32x128xf32>
    %8 = arith.mulf %6, %7 : vector<32x128xf32>
    %9 = vector.extract_strided_slice %3 {offsets = [0, 1], sizes = [32, 1], strides = [1, 1]} : vector<32x2xf32> to vector<32x1xf32>
    %10 = vector.extract_strided_slice %0 {offsets = [1, 0], sizes = [1, 128], strides = [1, 1]} : vector<2x128xf32> to vector<1x128xf32>
    %11 = vector.broadcast %9 : vector<32x1xf32> to vector<32x128xf32>
    %12 = vector.broadcast %10 : vector<1x128xf32> to vector<32x128xf32>
    %13 = arith.mulf %11, %12 : vector<32x128xf32>
    %14 = arith.addf %8, %13 : vector<32x128xf32>
    %c0_4 = arith.constant 0 : index
    %c0_5 = arith.constant 0 : index
    %c0_6 = arith.constant 0 : index
    %15 = vector.load %arg3[%c0_4, %c0_5, %c0_6] : memref<4x32x1xf32, #tpu.memory_space<vmem>>, vector<1x32x1xf32>
    %16 = vector.shape_cast %15 : vector<1x32x1xf32> to vector<32x1xf32>
    %17 = vector.broadcast %16 : vector<32x1xf32> to vector<32x128xf32>
    %18 = arith.addf %14, %17 : vector<32x128xf32>
    %19 = math.tanh %18 : vector<32x128xf32>
    %c0_7 = arith.constant 0 : index
    %c0_8 = arith.constant 0 : index
    %c0_9 = arith.constant 0 : index
    %20 = vector.load %arg4[%c0_7, %c0_8, %c0_9] : memref<4x32x32xf32, #tpu.memory_space<vmem>>, vector<1x32x32xf32>
    %21 = vector.shape_cast %20 : vector<1x32x32xf32> to vector<32x32xf32>
    %cst_10 = arith.constant dense<0.000000e+00> : vector<32x128xf32>
    %22 = tpu.matmul %21, %19, %cst_10 {dimension_numbers = #tpu.dot_dimension_numbers<[1], [0], [0], [1], [0, 0, 1, 1], [], []>} : vector<32x32xf32>, vector<32x128xf32>, vector<32x128xf32> -> vector<32x128xf32>
    %c0_11 = arith.constant 0 : index
    %c0_12 = arith.constant 0 : index
    %c0_13 = arith.constant 0 : index
    %23 = vector.load %arg5[%c0_11, %c0_12, %c0_13] : memref<4x32x1xf32, #tpu.memory_space<vmem>>, vector<1x32x1xf32>
    %24 = vector.shape_cast %23 : vector<1x32x1xf32> to vector<32x1xf32>
    %25 = vector.broadcast %24 : vector<32x1xf32> to vector<32x128xf32>
    %26 = arith.addf %22, %25 : vector<32x128xf32>
    %27 = math.tanh %26 : vector<32x128xf32>
    %c0_14 = arith.constant 0 : index
    %c0_15 = arith.constant 0 : index
    %c0_16 = arith.constant 0 : index
    %28 = vector.load %arg6[%c0_14, %c0_15, %c0_16] : memref<4x4x32xf32, #tpu.memory_space<vmem>>, vector<1x4x32xf32>
    %29 = vector.shape_cast %28 : vector<1x4x32xf32> to vector<4x32xf32>
    %cst_17 = arith.constant dense<0.000000e+00> : vector<4x128xf32>
    %30 = tpu.matmul %29, %27, %cst_17 {dimension_numbers = #tpu.dot_dimension_numbers<[1], [0], [0], [1], [0, 0, 1, 1], [], []>} : vector<4x32xf32>, vector<32x128xf32>, vector<4x128xf32> -> vector<4x128xf32>
    %c0_18 = arith.constant 0 : index
    %c0_19 = arith.constant 0 : index
    %c0_20 = arith.constant 0 : index
    %31 = vector.load %arg7[%c0_18, %c0_19, %c0_20] : memref<4x4x1xf32, #tpu.memory_space<vmem>>, vector<1x4x1xf32>
    %32 = vector.shape_cast %31 : vector<1x4x1xf32> to vector<4x1xf32>
    %33 = vector.broadcast %32 : vector<4x1xf32> to vector<4x128xf32>
    %34 = arith.addf %30, %33 : vector<4x128xf32>
    %35 = vector.extract_strided_slice %34 {offsets = [0, 0], sizes = [2, 128], strides = [1, 1]} : vector<4x128xf32> to vector<2x128xf32>
    %36 = vector.extract_strided_slice %34 {offsets = [2, 0], sizes = [2, 128], strides = [1, 1]} : vector<4x128xf32> to vector<2x128xf32>
    %37 = math.exp %36 : vector<2x128xf32>
    %38 = arith.mulf %0, %37 : vector<2x128xf32>
    %39 = arith.addf %38, %35 : vector<2x128xf32>
    %40 = vector.extract_strided_slice %36 {offsets = [0, 0], sizes = [1, 128], strides = [1, 1]} : vector<2x128xf32> to vector<1x128xf32>
    %41 = arith.addf %1, %40 : vector<1x128xf32>
    %42 = vector.extract_strided_slice %36 {offsets = [1, 0], sizes = [1, 128], strides = [1, 1]} : vector<2x128xf32> to vector<1x128xf32>
    %43 = arith.addf %41, %42 : vector<1x128xf32>
    %c1 = arith.constant 1 : index
    %c0_21 = arith.constant 0 : index
    %c0_22 = arith.constant 0 : index
    %44 = vector.load %arg2[%c1, %c0_21, %c0_22] : memref<4x32x2xf32, #tpu.memory_space<vmem>>, vector<1x32x2xf32>
    %45 = vector.shape_cast %44 : vector<1x32x2xf32> to vector<32x2xf32>
    %46 = vector.extract_strided_slice %45 {offsets = [0, 0], sizes = [32, 1], strides = [1, 1]} : vector<32x2xf32> to vector<32x1xf32>
    %47 = vector.extract_strided_slice %39 {offsets = [0, 0], sizes = [1, 128], strides = [1, 1]} : vector<2x128xf32> to vector<1x128xf32>
    %48 = vector.broadcast %46 : vector<32x1xf32> to vector<32x128xf32>
    %49 = vector.broadcast %47 : vector<1x128xf32> to vector<32x128xf32>
    %50 = arith.mulf %48, %49 : vector<32x128xf32>
    %51 = vector.extract_strided_slice %45 {offsets = [0, 1], sizes = [32, 1], strides = [1, 1]} : vector<32x2xf32> to vector<32x1xf32>
    %52 = vector.extract_strided_slice %39 {offsets = [1, 0], sizes = [1, 128], strides = [1, 1]} : vector<2x128xf32> to vector<1x128xf32>
    %53 = vector.broadcast %51 : vector<32x1xf32> to vector<32x128xf32>
    %54 = vector.broadcast %52 : vector<1x128xf32> to vector<32x128xf32>
    %55 = arith.mulf %53, %54 : vector<32x128xf32>
    %56 = arith.addf %50, %55 : vector<32x128xf32>
    %c1_23 = arith.constant 1 : index
    %c0_24 = arith.constant 0 : index
    %c0_25 = arith.constant 0 : index
    %57 = vector.load %arg3[%c1_23, %c0_24, %c0_25] : memref<4x32x1xf32, #tpu.memory_space<vmem>>, vector<1x32x1xf32>
    %58 = vector.shape_cast %57 : vector<1x32x1xf32> to vector<32x1xf32>
    %59 = vector.broadcast %58 : vector<32x1xf32> to vector<32x128xf32>
    %60 = arith.addf %56, %59 : vector<32x128xf32>
    %61 = math.tanh %60 : vector<32x128xf32>
    %c1_26 = arith.constant 1 : index
    %c0_27 = arith.constant 0 : index
    %c0_28 = arith.constant 0 : index
    %62 = vector.load %arg4[%c1_26, %c0_27, %c0_28] : memref<4x32x32xf32, #tpu.memory_space<vmem>>, vector<1x32x32xf32>
    %63 = vector.shape_cast %62 : vector<1x32x32xf32> to vector<32x32xf32>
    %cst_29 = arith.constant dense<0.000000e+00> : vector<32x128xf32>
    %64 = tpu.matmul %63, %61, %cst_29 {dimension_numbers = #tpu.dot_dimension_numbers<[1], [0], [0], [1], [0, 0, 1, 1], [], []>} : vector<32x32xf32>, vector<32x128xf32>, vector<32x128xf32> -> vector<32x128xf32>
    %c1_30 = arith.constant 1 : index
    %c0_31 = arith.constant 0 : index
    %c0_32 = arith.constant 0 : index
    %65 = vector.load %arg5[%c1_30, %c0_31, %c0_32] : memref<4x32x1xf32, #tpu.memory_space<vmem>>, vector<1x32x1xf32>
    %66 = vector.shape_cast %65 : vector<1x32x1xf32> to vector<32x1xf32>
    %67 = vector.broadcast %66 : vector<32x1xf32> to vector<32x128xf32>
    %68 = arith.addf %64, %67 : vector<32x128xf32>
    %69 = math.tanh %68 : vector<32x128xf32>
    %c1_33 = arith.constant 1 : index
    %c0_34 = arith.constant 0 : index
    %c0_35 = arith.constant 0 : index
    %70 = vector.load %arg6[%c1_33, %c0_34, %c0_35] : memref<4x4x32xf32, #tpu.memory_space<vmem>>, vector<1x4x32xf32>
    %71 = vector.shape_cast %70 : vector<1x4x32xf32> to vector<4x32xf32>
    %cst_36 = arith.constant dense<0.000000e+00> : vector<4x128xf32>
    %72 = tpu.matmul %71, %69, %cst_36 {dimension_numbers = #tpu.dot_dimension_numbers<[1], [0], [0], [1], [0, 0, 1, 1], [], []>} : vector<4x32xf32>, vector<32x128xf32>, vector<4x128xf32> -> vector<4x128xf32>
    %c1_37 = arith.constant 1 : index
    %c0_38 = arith.constant 0 : index
    %c0_39 = arith.constant 0 : index
    %73 = vector.load %arg7[%c1_37, %c0_38, %c0_39] : memref<4x4x1xf32, #tpu.memory_space<vmem>>, vector<1x4x1xf32>
    %74 = vector.shape_cast %73 : vector<1x4x1xf32> to vector<4x1xf32>
    %75 = vector.broadcast %74 : vector<4x1xf32> to vector<4x128xf32>
    %76 = arith.addf %72, %75 : vector<4x128xf32>
    %77 = vector.extract_strided_slice %76 {offsets = [0, 0], sizes = [2, 128], strides = [1, 1]} : vector<4x128xf32> to vector<2x128xf32>
    %78 = vector.extract_strided_slice %76 {offsets = [2, 0], sizes = [2, 128], strides = [1, 1]} : vector<4x128xf32> to vector<2x128xf32>
    %79 = math.exp %78 : vector<2x128xf32>
    %80 = arith.mulf %39, %79 : vector<2x128xf32>
    %81 = arith.addf %80, %77 : vector<2x128xf32>
    %82 = vector.extract_strided_slice %78 {offsets = [0, 0], sizes = [1, 128], strides = [1, 1]} : vector<2x128xf32> to vector<1x128xf32>
    %83 = arith.addf %43, %82 : vector<1x128xf32>
    %84 = vector.extract_strided_slice %78 {offsets = [1, 0], sizes = [1, 128], strides = [1, 1]} : vector<2x128xf32> to vector<1x128xf32>
    %85 = arith.addf %83, %84 : vector<1x128xf32>
    %c2 = arith.constant 2 : index
    %c0_40 = arith.constant 0 : index
    %c0_41 = arith.constant 0 : index
    %86 = vector.load %arg2[%c2, %c0_40, %c0_41] : memref<4x32x2xf32, #tpu.memory_space<vmem>>, vector<1x32x2xf32>
    %87 = vector.shape_cast %86 : vector<1x32x2xf32> to vector<32x2xf32>
    %88 = vector.extract_strided_slice %87 {offsets = [0, 0], sizes = [32, 1], strides = [1, 1]} : vector<32x2xf32> to vector<32x1xf32>
    %89 = vector.extract_strided_slice %81 {offsets = [0, 0], sizes = [1, 128], strides = [1, 1]} : vector<2x128xf32> to vector<1x128xf32>
    %90 = vector.broadcast %88 : vector<32x1xf32> to vector<32x128xf32>
    %91 = vector.broadcast %89 : vector<1x128xf32> to vector<32x128xf32>
    %92 = arith.mulf %90, %91 : vector<32x128xf32>
    %93 = vector.extract_strided_slice %87 {offsets = [0, 1], sizes = [32, 1], strides = [1, 1]} : vector<32x2xf32> to vector<32x1xf32>
    %94 = vector.extract_strided_slice %81 {offsets = [1, 0], sizes = [1, 128], strides = [1, 1]} : vector<2x128xf32> to vector<1x128xf32>
    %95 = vector.broadcast %93 : vector<32x1xf32> to vector<32x128xf32>
    %96 = vector.broadcast %94 : vector<1x128xf32> to vector<32x128xf32>
    %97 = arith.mulf %95, %96 : vector<32x128xf32>
    %98 = arith.addf %92, %97 : vector<32x128xf32>
    %c2_42 = arith.constant 2 : index
    %c0_43 = arith.constant 0 : index
    %c0_44 = arith.constant 0 : index
    %99 = vector.load %arg3[%c2_42, %c0_43, %c0_44] : memref<4x32x1xf32, #tpu.memory_space<vmem>>, vector<1x32x1xf32>
    %100 = vector.shape_cast %99 : vector<1x32x1xf32> to vector<32x1xf32>
    %101 = vector.broadcast %100 : vector<32x1xf32> to vector<32x128xf32>
    %102 = arith.addf %98, %101 : vector<32x128xf32>
    %103 = math.tanh %102 : vector<32x128xf32>
    %c2_45 = arith.constant 2 : index
    %c0_46 = arith.constant 0 : index
    %c0_47 = arith.constant 0 : index
    %104 = vector.load %arg4[%c2_45, %c0_46, %c0_47] : memref<4x32x32xf32, #tpu.memory_space<vmem>>, vector<1x32x32xf32>
    %105 = vector.shape_cast %104 : vector<1x32x32xf32> to vector<32x32xf32>
    %cst_48 = arith.constant dense<0.000000e+00> : vector<32x128xf32>
    %106 = tpu.matmul %105, %103, %cst_48 {dimension_numbers = #tpu.dot_dimension_numbers<[1], [0], [0], [1], [0, 0, 1, 1], [], []>} : vector<32x32xf32>, vector<32x128xf32>, vector<32x128xf32> -> vector<32x128xf32>
    %c2_49 = arith.constant 2 : index
    %c0_50 = arith.constant 0 : index
    %c0_51 = arith.constant 0 : index
    %107 = vector.load %arg5[%c2_49, %c0_50, %c0_51] : memref<4x32x1xf32, #tpu.memory_space<vmem>>, vector<1x32x1xf32>
    %108 = vector.shape_cast %107 : vector<1x32x1xf32> to vector<32x1xf32>
    %109 = vector.broadcast %108 : vector<32x1xf32> to vector<32x128xf32>
    %110 = arith.addf %106, %109 : vector<32x128xf32>
    %111 = math.tanh %110 : vector<32x128xf32>
    %c2_52 = arith.constant 2 : index
    %c0_53 = arith.constant 0 : index
    %c0_54 = arith.constant 0 : index
    %112 = vector.load %arg6[%c2_52, %c0_53, %c0_54] : memref<4x4x32xf32, #tpu.memory_space<vmem>>, vector<1x4x32xf32>
    %113 = vector.shape_cast %112 : vector<1x4x32xf32> to vector<4x32xf32>
    %cst_55 = arith.constant dense<0.000000e+00> : vector<4x128xf32>
    %114 = tpu.matmul %113, %111, %cst_55 {dimension_numbers = #tpu.dot_dimension_numbers<[1], [0], [0], [1], [0, 0, 1, 1], [], []>} : vector<4x32xf32>, vector<32x128xf32>, vector<4x128xf32> -> vector<4x128xf32>
    %c2_56 = arith.constant 2 : index
    %c0_57 = arith.constant 0 : index
    %c0_58 = arith.constant 0 : index
    %115 = vector.load %arg7[%c2_56, %c0_57, %c0_58] : memref<4x4x1xf32, #tpu.memory_space<vmem>>, vector<1x4x1xf32>
    %116 = vector.shape_cast %115 : vector<1x4x1xf32> to vector<4x1xf32>
    %117 = vector.broadcast %116 : vector<4x1xf32> to vector<4x128xf32>
    %118 = arith.addf %114, %117 : vector<4x128xf32>
    %119 = vector.extract_strided_slice %118 {offsets = [0, 0], sizes = [2, 128], strides = [1, 1]} : vector<4x128xf32> to vector<2x128xf32>
    %120 = vector.extract_strided_slice %118 {offsets = [2, 0], sizes = [2, 128], strides = [1, 1]} : vector<4x128xf32> to vector<2x128xf32>
    %121 = math.exp %120 : vector<2x128xf32>
    %122 = arith.mulf %81, %121 : vector<2x128xf32>
    %123 = arith.addf %122, %119 : vector<2x128xf32>
    %124 = vector.extract_strided_slice %120 {offsets = [0, 0], sizes = [1, 128], strides = [1, 1]} : vector<2x128xf32> to vector<1x128xf32>
    %125 = arith.addf %85, %124 : vector<1x128xf32>
    %126 = vector.extract_strided_slice %120 {offsets = [1, 0], sizes = [1, 128], strides = [1, 1]} : vector<2x128xf32> to vector<1x128xf32>
    %127 = arith.addf %125, %126 : vector<1x128xf32>
    %c3 = arith.constant 3 : index
    %c0_59 = arith.constant 0 : index
    %c0_60 = arith.constant 0 : index
    %128 = vector.load %arg2[%c3, %c0_59, %c0_60] : memref<4x32x2xf32, #tpu.memory_space<vmem>>, vector<1x32x2xf32>
    %129 = vector.shape_cast %128 : vector<1x32x2xf32> to vector<32x2xf32>
    %130 = vector.extract_strided_slice %129 {offsets = [0, 0], sizes = [32, 1], strides = [1, 1]} : vector<32x2xf32> to vector<32x1xf32>
    %131 = vector.extract_strided_slice %123 {offsets = [0, 0], sizes = [1, 128], strides = [1, 1]} : vector<2x128xf32> to vector<1x128xf32>
    %132 = vector.broadcast %130 : vector<32x1xf32> to vector<32x128xf32>
    %133 = vector.broadcast %131 : vector<1x128xf32> to vector<32x128xf32>
    %134 = arith.mulf %132, %133 : vector<32x128xf32>
    %135 = vector.extract_strided_slice %129 {offsets = [0, 1], sizes = [32, 1], strides = [1, 1]} : vector<32x2xf32> to vector<32x1xf32>
    %136 = vector.extract_strided_slice %123 {offsets = [1, 0], sizes = [1, 128], strides = [1, 1]} : vector<2x128xf32> to vector<1x128xf32>
    %137 = vector.broadcast %135 : vector<32x1xf32> to vector<32x128xf32>
    %138 = vector.broadcast %136 : vector<1x128xf32> to vector<32x128xf32>
    %139 = arith.mulf %137, %138 : vector<32x128xf32>
    %140 = arith.addf %134, %139 : vector<32x128xf32>
    %c3_61 = arith.constant 3 : index
    %c0_62 = arith.constant 0 : index
    %c0_63 = arith.constant 0 : index
    %141 = vector.load %arg3[%c3_61, %c0_62, %c0_63] : memref<4x32x1xf32, #tpu.memory_space<vmem>>, vector<1x32x1xf32>
    %142 = vector.shape_cast %141 : vector<1x32x1xf32> to vector<32x1xf32>
    %143 = vector.broadcast %142 : vector<32x1xf32> to vector<32x128xf32>
    %144 = arith.addf %140, %143 : vector<32x128xf32>
    %145 = math.tanh %144 : vector<32x128xf32>
    %c3_64 = arith.constant 3 : index
    %c0_65 = arith.constant 0 : index
    %c0_66 = arith.constant 0 : index
    %146 = vector.load %arg4[%c3_64, %c0_65, %c0_66] : memref<4x32x32xf32, #tpu.memory_space<vmem>>, vector<1x32x32xf32>
    %147 = vector.shape_cast %146 : vector<1x32x32xf32> to vector<32x32xf32>
    %cst_67 = arith.constant dense<0.000000e+00> : vector<32x128xf32>
    %148 = tpu.matmul %147, %145, %cst_67 {dimension_numbers = #tpu.dot_dimension_numbers<[1], [0], [0], [1], [0, 0, 1, 1], [], []>} : vector<32x32xf32>, vector<32x128xf32>, vector<32x128xf32> -> vector<32x128xf32>
    %c3_68 = arith.constant 3 : index
    %c0_69 = arith.constant 0 : index
    %c0_70 = arith.constant 0 : index
    %149 = vector.load %arg5[%c3_68, %c0_69, %c0_70] : memref<4x32x1xf32, #tpu.memory_space<vmem>>, vector<1x32x1xf32>
    %150 = vector.shape_cast %149 : vector<1x32x1xf32> to vector<32x1xf32>
    %151 = vector.broadcast %150 : vector<32x1xf32> to vector<32x128xf32>
    %152 = arith.addf %148, %151 : vector<32x128xf32>
    %153 = math.tanh %152 : vector<32x128xf32>
    %c3_71 = arith.constant 3 : index
    %c0_72 = arith.constant 0 : index
    %c0_73 = arith.constant 0 : index
    %154 = vector.load %arg6[%c3_71, %c0_72, %c0_73] : memref<4x4x32xf32, #tpu.memory_space<vmem>>, vector<1x4x32xf32>
    %155 = vector.shape_cast %154 : vector<1x4x32xf32> to vector<4x32xf32>
    %cst_74 = arith.constant dense<0.000000e+00> : vector<4x128xf32>
    %156 = tpu.matmul %155, %153, %cst_74 {dimension_numbers = #tpu.dot_dimension_numbers<[1], [0], [0], [1], [0, 0, 1, 1], [], []>} : vector<4x32xf32>, vector<32x128xf32>, vector<4x128xf32> -> vector<4x128xf32>
    %c3_75 = arith.constant 3 : index
    %c0_76 = arith.constant 0 : index
    %c0_77 = arith.constant 0 : index
    %157 = vector.load %arg7[%c3_75, %c0_76, %c0_77] : memref<4x4x1xf32, #tpu.memory_space<vmem>>, vector<1x4x1xf32>
    %158 = vector.shape_cast %157 : vector<1x4x1xf32> to vector<4x1xf32>
    %159 = vector.broadcast %158 : vector<4x1xf32> to vector<4x128xf32>
    %160 = arith.addf %156, %159 : vector<4x128xf32>
    %161 = vector.extract_strided_slice %160 {offsets = [0, 0], sizes = [2, 128], strides = [1, 1]} : vector<4x128xf32> to vector<2x128xf32>
    %162 = vector.extract_strided_slice %160 {offsets = [2, 0], sizes = [2, 128], strides = [1, 1]} : vector<4x128xf32> to vector<2x128xf32>
    %163 = math.exp %162 : vector<2x128xf32>
    %164 = arith.mulf %123, %163 : vector<2x128xf32>
    %165 = arith.addf %164, %161 : vector<2x128xf32>
    %166 = vector.extract_strided_slice %162 {offsets = [0, 0], sizes = [1, 128], strides = [1, 1]} : vector<2x128xf32> to vector<1x128xf32>
    %167 = arith.addf %127, %166 : vector<1x128xf32>
    %168 = vector.extract_strided_slice %162 {offsets = [1, 0], sizes = [1, 128], strides = [1, 1]} : vector<2x128xf32> to vector<1x128xf32>
    %169 = arith.addf %167, %168 : vector<1x128xf32>
    %c0_78 = arith.constant 0 : index
    %c0_79 = arith.constant 0 : index
    %170 = vector.load %arg8[%c0_78, %c0_79] : memref<3x128xf32, #tpu.memory_space<vmem>>, vector<2x128xf32>
    tpu.vector_store %arg8[%c0_78, %c0_79], %165 {strides = array<i32>} : memref<3x128xf32, #tpu.memory_space<vmem>>, vector<2x128xf32>,
    %c2_80 = arith.constant 2 : index
    %c0_81 = arith.constant 0 : index
    %171 = vector.load %arg8[%c2_80, %c0_81] : memref<3x128xf32, #tpu.memory_space<vmem>>, vector<1x128xf32>
    tpu.vector_store %arg8[%c2_80, %c0_81], %169 {strides = array<i32>} : memref<3x128xf32, #tpu.memory_space<vmem>>, vector<1x128xf32>,
    return
  }
  func.func @transform_0(%arg0: i32) -> (i32, i32) {
    %c0_i32 = arith.constant 0 : i32
    %c0_i32_0 = arith.constant 0 : i32
    return %c0_i32, %arg0 : i32, i32
  }
  func.func @transform_1(%arg0: i32) -> (i32, i32, i32) {
    %c0_i32 = arith.constant 0 : i32
    %c0_i32_0 = arith.constant 0 : i32
    %c0_i32_1 = arith.constant 0 : i32
    %c0_i32_2 = arith.constant 0 : i32
    return %c0_i32, %c0_i32_0, %c0_i32_1 : i32, i32, i32
  }
  func.func @transform_2(%arg0: i32) -> (i32, i32, i32) {
    %c0_i32 = arith.constant 0 : i32
    %c0_i32_0 = arith.constant 0 : i32
    %c0_i32_1 = arith.constant 0 : i32
    %c0_i32_2 = arith.constant 0 : i32
    return %c0_i32, %c0_i32_0, %c0_i32_1 : i32, i32, i32
  }
  func.func @transform_3(%arg0: i32) -> (i32, i32, i32) {
    %c0_i32 = arith.constant 0 : i32
    %c0_i32_0 = arith.constant 0 : i32
    %c0_i32_1 = arith.constant 0 : i32
    %c0_i32_2 = arith.constant 0 : i32
    return %c0_i32, %c0_i32_0, %c0_i32_1 : i32, i32, i32
  }
  func.func @transform_4(%arg0: i32) -> (i32, i32, i32) {
    %c0_i32 = arith.constant 0 : i32
    %c0_i32_0 = arith.constant 0 : i32
    %c0_i32_1 = arith.constant 0 : i32
    %c0_i32_2 = arith.constant 0 : i32
    return %c0_i32, %c0_i32_0, %c0_i32_1 : i32, i32, i32
  }
  func.func @transform_5(%arg0: i32) -> (i32, i32, i32) {
    %c0_i32 = arith.constant 0 : i32
    %c0_i32_0 = arith.constant 0 : i32
    %c0_i32_1 = arith.constant 0 : i32
    %c0_i32_2 = arith.constant 0 : i32
    return %c0_i32, %c0_i32_0, %c0_i32_1 : i32, i32, i32
  }
  func.func @transform_6(%arg0: i32) -> (i32, i32, i32) {
    %c0_i32 = arith.constant 0 : i32
    %c0_i32_0 = arith.constant 0 : i32
    %c0_i32_1 = arith.constant 0 : i32
    %c0_i32_2 = arith.constant 0 : i32
    return %c0_i32, %c0_i32_0, %c0_i32_1 : i32, i32, i32
  }
  func.func @transform_7(%arg0: i32) -> (i32, i32) {
    %c0_i32 = arith.constant 0 : i32
    %c0_i32_0 = arith.constant 0 : i32
    return %c0_i32, %arg0 : i32, i32
  }
}

</mosaic_0001>

<llo_original>
// kernel: tpu_custom_call.1
$region0: #{tpu_custom_call.1}
  #allocation0 [shape = 'u32[]', space=smem, size = 0x4, offset = 0x4, fixed_abs, tag = 'smem constant byte address 0x4 - core index']
  #allocation1 [shape = 'u32[72,128]{1,0:T(1,128)}', space=vmem, size = 0x9000, scoped, tag = 'internal scratch']
  %s0 = inlined_call_operand.vmem [shape: f32[2,256], index: 0, kind: input, shape index: {}]
  %s1 = inlined_call_operand.vmem [shape: f32[4,32,2], index: 1, kind: input, shape index: {}]
  %s2 = inlined_call_operand.vmem [shape: f32[4,32,1], index: 2, kind: input, shape index: {}]
  %s3 = inlined_call_operand.vmem [shape: f32[4,32,32], index: 3, kind: input, shape index: {}]
  %s4 = inlined_call_operand.vmem [shape: f32[4,32,1], index: 4, kind: input, shape index: {}]
  %s5 = inlined_call_operand.vmem [shape: f32[4,4,32], index: 5, kind: input, shape index: {}]
  %s6 = inlined_call_operand.vmem [shape: f32[4,4,1], index: 6, kind: input, shape index: {}]
  %s7 = inlined_call_operand.hbm [shape: f32[3,256], index: 7, kind: output, shape index: {}]
  %s8 = sld [smem:[#allocation0]]
  $region61: #{tpu_custom_call.1} parent=0
    _
  %s10 = ssub.s32 1, %s8
  %s11 = scalar_select 0, %s10, %s8
  $region1: #{tpu_custom_call.1} parent=0
    #allocation2 [shape = 'u8[4096]{0}', space=vmem, size = 0x1000, scoped, tag = 'output window, operand 0']
    #allocation3 [shape = 's32[2]{0}', space=sflag, size = 0x8, scoped, tag = 'scoped memory for tpu_custom_call.1']
    %12 = vsyncpa [#allocation3], 0
    %s13 = scalar_lea.sflag [#allocation3], 1
    %14 = vsyncpa %s13, 0
    loop: start=0, step=1, limit=4
    $region2: #{tpu_custom_call.1} parent=1 // loop_pre_header
      _
    $region3: #{tpu_custom_call.1} parent=1 // loop_header
      %s16 = sphi 0, %s20
      %p17 = scmp.ge.s32.totalorder %s16, 4
      %s26 = sphi 0, %s28
      %s29 = sphi 0, %s26
      %s30 = sphi 0, %s29
      %s46 = sphi 0, %s30
      %s50 = sphi 0, %s50
      %s52 = sphi 0, %s50
      %s53 = sphi 0, %s52
      %s67 = sphi 0, %s53
      %s71 = sphi 0, %s71
      %s73 = sphi 0, %s71
      %s74 = sphi 0, %s73
      %s88 = sphi 0, %s74
      %s92 = sphi 0, %s92
      %s94 = sphi 0, %s92
      %s95 = sphi 0, %s94
      %s109 = sphi 0, %s95
      %s113 = sphi 0, %s113
      %s115 = sphi 0, %s113
      %s116 = sphi 0, %s115
      %s130 = sphi 0, %s116
      %s134 = sphi 0, %s134
      %s136 = sphi 0, %s134
      %s137 = sphi 0, %s136
      %s151 = sphi 0, %s137
      %s155 = sphi 0, %s155
      %s157 = sphi 0, %s155
      %s158 = sphi 0, %s157
      %s172 = sphi 0, %s158
      %s178 = sphi 0, %s180
      %s181 = sphi 0, %s178
      %s182 = sphi 0, %s181
      %s198 = sphi 0, %s182
    $region4: #{tpu_custom_call.1} parent=1 // loop_header_branch
      %19 = sbr.rel (%p17) target = $region8
    $region5: #{tpu_custom_call.1} parent=1 // loop_body
      %s21 = ssub.s32 %s16, 1
      %s22 = ssub.s32 %s16, 2
      %s23 = sadd.s32 %s16, 1
      %s24 = ssub.s32 %s16, %s23
      %p25 = scmp.eq.s32.totalorder %s24, 0
      %s27 = sadd.s32 %s26, 1
      %s28 = scalar_select %p25, %s26, %s27
      %p31 = pneg %p25
      %p32 = scmp.eq.s32.totalorder %s16, 1
      %p33 = por %p31, %p32
      %p34 = scmp.ne.s32.totalorder %s26, %s29
      %p35 = scmp.eq.s32.totalorder %s16, 0
      %p36 = por %p34, %p35
      %p37 = scmp.ne.s32.totalorder %s26, %s29
      %p38 = scmp.eq.s32.totalorder %s21, 1
      %p39 = por %p37, %p38
      %p40 = scmp.ne.s32.totalorder %s29, %s30
      %p41 = scmp.eq.s32.totalorder %s21, 0
      %p42 = por %p40, %p41
      %p43 = scmp.ne.s32.totalorder %s29, %s30
      %p44 = scmp.eq.s32.totalorder %s22, 1
      %p45 = por %p43, %p44
      %p47 = scmp.ne.s32.totalorder %s30, %s46
      %p48 = scmp.eq.s32.totalorder %s22, 0
      %p49 = por %p47, %p48
      %s51 = sadd.s32 %s50, 1
      %p54 = scmp.eq.s32.totalorder %s16, 1
      %p55 = scmp.ne.s32.totalorder %s50, %s52
      %p56 = scmp.eq.s32.totalorder %s16, 0
      %p57 = por %p55, %p56
      %p58 = scmp.ne.s32.totalorder %s50, %s52
      %p59 = scmp.eq.s32.totalorder %s21, 1
      %p60 = por %p58, %p59
      %p61 = scmp.ne.s32.totalorder %s52, %s53
      %p62 = scmp.eq.s32.totalorder %s21, 0
      %p63 = por %p61, %p62
      %p64 = scmp.ne.s32.totalorder %s52, %s53
      %p65 = scmp.eq.s32.totalorder %s22, 1
      %p66 = por %p64, %p65
      %p68 = scmp.ne.s32.totalorder %s53, %s67
      %p69 = scmp.eq.s32.totalorder %s22, 0
      %p70 = por %p68, %p69
      %s72 = sadd.s32 %s71, 1
      %p75 = scmp.eq.s32.totalorder %s16, 1
      %p76 = scmp.ne.s32.totalorder %s71, %s73
      %p77 = scmp.eq.s32.totalorder %s16, 0
      %p78 = por %p76, %p77
      %p79 = scmp.ne.s32.totalorder %s71, %s73
      %p80 = scmp.eq.s32.totalorder %s21, 1
      %p81 = por %p79, %p80
      %p82 = scmp.ne.s32.totalorder %s73, %s74
      %p83 = scmp.eq.s32.totalorder %s21, 0
      %p84 = por %p82, %p83
      %p85 = scmp.ne.s32.totalorder %s73, %s74
      %p86 = scmp.eq.s32.totalorder %s22, 1
      %p87 = por %p85, %p86
      %p89 = scmp.ne.s32.totalorder %s74, %s88
      %p90 = scmp.eq.s32.totalorder %s22, 0
      %p91 = por %p89, %p90
      %s93 = sadd.s32 %s92, 1
      %p96 = scmp.eq.s32.totalorder %s16, 1
      %p97 = scmp.ne.s32.totalorder %s92, %s94
      %p98 = scmp.eq.s32.totalorder %s16, 0
      %p99 = por %p97, %p98
      %p100 = scmp.ne.s32.totalorder %s92, %s94
      %p101 = scmp.eq.s32.totalorder %s21, 1
      %p102 = por %p100, %p101
      %p103 = scmp.ne.s32.totalorder %s94, %s95
      %p104 = scmp.eq.s32.totalorder %s21, 0
      %p105 = por %p103, %p104
      %p106 = scmp.ne.s32.totalorder %s94, %s95
      %p107 = scmp.eq.s32.totalorder %s22, 1
      %p108 = por %p106, %p107
      %p110 = scmp.ne.s32.totalorder %s95, %s109
      %p111 = scmp.eq.s32.totalorder %s22, 0
      %p112 = por %p110, %p111
      %s114 = sadd.s32 %s113, 1
      %p117 = scmp.eq.s32.totalorder %s16, 1
      %p118 = scmp.ne.s32.totalorder %s113, %s115
      %p119 = scmp.eq.s32.totalorder %s16, 0
      %p120 = por %p118, %p119
      %p121 = scmp.ne.s32.totalorder %s113, %s115
      %p122 = scmp.eq.s32.totalorder %s21, 1
      %p123 = por %p121, %p122
      %p124 = scmp.ne.s32.totalorder %s115, %s116
      %p125 = scmp.eq.s32.totalorder %s21, 0
      %p126 = por %p124, %p125
      %p127 = scmp.ne.s32.totalorder %s115, %s116
      %p128 = scmp.eq.s32.totalorder %s22, 1
      %p129 = por %p127, %p128
      %p131 = scmp.ne.s32.totalorder %s116, %s130
      %p132 = scmp.eq.s32.totalorder %s22, 0
      %p133 = por %p131, %p132
      %s135 = sadd.s32 %s134, 1
      %p138 = scmp.eq.s32.totalorder %s16, 1
      %p139 = scmp.ne.s32.totalorder %s134, %s136
      %p140 = scmp.eq.s32.totalorder %s16, 0
      %p141 = por %p139, %p140
      %p142 = scmp.ne.s32.totalorder %s134, %s136
      %p143 = scmp.eq.s32.totalorder %s21, 1
      %p144 = por %p142, %p143
      %p145 = scmp.ne.s32.totalorder %s136, %s137
      %p146 = scmp.eq.s32.totalorder %s21, 0
      %p147 = por %p145, %p146
      %p148 = scmp.ne.s32.totalorder %s136, %s137
      %p149 = scmp.eq.s32.totalorder %s22, 1
      %p150 = por %p148, %p149
      %p152 = scmp.ne.s32.totalorder %s137, %s151
      %p153 = scmp.eq.s32.totalorder %s22, 0
      %p154 = por %p152, %p153
      %s156 = sadd.s32 %s155, 1
      %p159 = scmp.eq.s32.totalorder %s16, 1
      %p160 = scmp.ne.s32.totalorder %s155, %s157
      %p161 = scmp.eq.s32.totalorder %s16, 0
      %p162 = por %p160, %p161
      %p163 = scmp.ne.s32.totalorder %s155, %s157
      %p164 = scmp.eq.s32.totalorder %s21, 1
      %p165 = por %p163, %p164
      %p166 = scmp.ne.s32.totalorder %s157, %s158
      %p167 = scmp.eq.s32.totalorder %s21, 0
      %p168 = por %p166, %p167
      %p169 = scmp.ne.s32.totalorder %s157, %s158
      %p170 = scmp.eq.s32.totalorder %s22, 1
      %p171 = por %p169, %p170
      %p173 = scmp.ne.s32.totalorder %s158, %s172
      %p174 = scmp.eq.s32.totalorder %s22, 0
      %p175 = por %p173, %p174
      %s176 = ssub.s32 %s16, %s23
      %p177 = scmp.eq.s32.totalorder %s176, 0
      %s179 = sadd.s32 %s178, 1
      %s180 = scalar_select %p177, %s178, %s179
      %p183 = pneg %p177
      %p184 = scmp.eq.s32.totalorder %s16, 1
      %p185 = por %p183, %p184
      %p186 = scmp.ne.s32.totalorder %s178, %s181
      %p187 = scmp.eq.s32.totalorder %s16, 0
      %p188 = por %p186, %p187
      %p189 = scmp.ne.s32.totalorder %s178, %s181
      %p190 = scmp.eq.s32.totalorder %s21, 1
      %p191 = por %p189, %p190
      %p192 = scmp.ne.s32.totalorder %s181, %s182
      %p193 = scmp.eq.s32.totalorder %s21, 0
      %p194 = por %p192, %p193
      %p195 = scmp.ne.s32.totalorder %s181, %s182
      %p196 = scmp.eq.s32.totalorder %s22, 1
      %p197 = por %p195, %p196
      %p199 = scmp.ne.s32.totalorder %s182, %s198
      %p200 = scmp.eq.s32.totalorder %s22, 0
      %p201 = por %p199, %p200
      %p202 = scmp.le.s32.totalorder 1, %s16
      %p203 = scmp.lt.s32.totalorder %s16, 3
      %p204 = pnand %p202, %p203
      %p205 = pneg %p204
      // Predicated region
      $region9: #{tpu_custom_call.1} parent=5 // pred_check
        _
      $region10: #{tpu_custom_call.1} parent=5 // pred_check_branch
        %207 = sbr.rel (%p204) target = $region12
      $region11: #{tpu_custom_call.1} parent=5 // pred_region
        %s208 = ssub.s32 %s16, 1
        // Predicated region
        $region13: #{tpu_custom_call.1} parent=11 // pred_check
          %p209 = pneg %p63
        $region14: #{tpu_custom_call.1} parent=11 // pred_check_branch
          %211 = sbr.rel (%p209) target = $region16
        $region15: #{tpu_custom_call.1} parent=11 // pred_region
          _
        $region16: #{tpu_custom_call.1} parent=11 // pred_fallthru
          _
        // Predicated region
        $region17: #{tpu_custom_call.1} parent=11 // pred_check
          %p212 = pneg %p84
        $region18: #{tpu_custom_call.1} parent=11 // pred_check_branch
          %214 = sbr.rel (%p212) target = $region20
        $region19: #{tpu_custom_call.1} parent=11 // pred_region
          _
        $region20: #{tpu_custom_call.1} parent=11 // pred_fallthru
          _
        // Predicated region
        $region21: #{tpu_custom_call.1} parent=11 // pred_check
          %p215 = pneg %p105
        $region22: #{tpu_custom_call.1} parent=11 // pred_check_branch
          %217 = sbr.rel (%p215) target = $region24
        $region23: #{tpu_custom_call.1} parent=11 // pred_region
          _
        $region24: #{tpu_custom_call.1} parent=11 // pred_fallthru
          _
        // Predicated region
        $region25: #{tpu_custom_call.1} parent=11 // pred_check
          %p218 = pneg %p126
        $region26: #{tpu_custom_call.1} parent=11 // pred_check_branch
          %220 = sbr.rel (%p218) target = $region28
        $region27: #{tpu_custom_call.1} parent=11 // pred_region
          _
        $region28: #{tpu_custom_call.1} parent=11 // pred_fallthru
          _
        // Predicated region
        $region29: #{tpu_custom_call.1} parent=11 // pred_check
          %p221 = pneg %p147
        $region30: #{tpu_custom_call.1} parent=11 // pred_check_branch
          %223 = sbr.rel (%p221) target = $region32
        $region31: #{tpu_custom_call.1} parent=11 // pred_region
          _
        $region32: #{tpu_custom_call.1} parent=11 // pred_fallthru
          _
        // Predicated region
        $region33: #{tpu_custom_call.1} parent=11 // pred_check
          %p224 = pneg %p168
        $region34: #{tpu_custom_call.1} parent=11 // pred_check_branch
          %226 = sbr.rel (%p224) target = $region36
        $region35: #{tpu_custom_call.1} parent=11 // pred_region
          _
        $region36: #{tpu_custom_call.1} parent=11 // pred_fallthru
          _
      $region12: #{tpu_custom_call.1} parent=5 // pred_fallthru
        _
      %p227 = scmp.lt.s32.totalorder %s16, 2
      // Predicated region
      $region37: #{tpu_custom_call.1} parent=5 // pred_check
        %p228 = pneg %p227
      $region38: #{tpu_custom_call.1} parent=5 // pred_check_branch
        %230 = sbr.rel (%p228) target = $region40
      $region39: #{tpu_custom_call.1} parent=5 // pred_region
        // Predicated region
        $region41: #{tpu_custom_call.1} parent=39 // pred_check
          %p231 = pneg %p36
        $region42: #{tpu_custom_call.1} parent=39 // pred_check_branch
          %233 = sbr.rel (%p231) target = $region44
        $region43: #{tpu_custom_call.1} parent=39 // pred_region
          %p234 = scmp.lt.s32.totalorder %s16, 1
          %s235 = scalar_select %p234, %s16, 1
          %s236 = smul.addr %s235, 2
          %s237 = scalar_lea.vmem %s0, %s236
        $region44: #{tpu_custom_call.1} parent=39 // pred_fallthru
          _
      $region40: #{tpu_custom_call.1} parent=5 // pred_fallthru
        _
      %p238 = scmp.le.s32.totalorder 1, %s16
      %p239 = scmp.lt.s32.totalorder %s16, 3
      %p240 = pnand %p238, %p239
      %p241 = pneg %p240
      // Predicated region
      $region45: #{tpu_custom_call.1} parent=5 // pred_check
        _
      $region46: #{tpu_custom_call.1} parent=5 // pred_check_branch
        %243 = sbr.rel (%p240) target = $region48
      $region47: #{tpu_custom_call.1} parent=5 // pred_region
        %s244 = ssub.s32 %s16, 1
        %p245 = scmp.lt.s32.totalorder %s21, 1
        %s246 = scalar_select %p245, %s21, 1
        %s247 = smul.addr %s246, 2
        %s248 = scalar_lea.vmem %s0, %s247
        %p249 = pneg %p42
        %p250 = pneg %p39
        %p251 = pneg %p63
        %p252 = pneg %p60
        %p253 = pneg %p84
        %p254 = pneg %p81
        %p255 = pneg %p105
        %p256 = pneg %p102
        %p257 = pneg %p126
        %p258 = pneg %p123
        %p259 = pneg %p147
        %p260 = pneg %p144
        %p261 = pneg %p168
        %p262 = pneg %p165
        %p263 = pneg %p194
        %p264 = pneg %p191
        %s265 = sand.u32 %s181, 1
        %s266 = scalar_lea.sflag [#allocation3], %s265
        %s267 = sand.u32 %s181, 1
        %s268 = smul.addr %s267, 4
        %s269 = scalar_lea.vmem [#allocation2], %s268
        %p270 = scmp.lt.s32.totalorder %s21, 1
        %s271 = scalar_select %p270, %s21, 1
        %s272 = smul.addr %s271, 2
        %s273 = scalar_lea.vmem %s0, %s272
        %v274 = vld [vmem:[%s273] sm:$0x3]
        %v275 = vld [vmem:[%s1] sm:$0xff]
        %v276 = vld [vmem:[%s1 + $0x8] sm:$0xff]
        %v277 = vld [vmem:[%s1 + $0x10] sm:$0xff]
        %v278 = vld [vmem:[%s1 + $0x18] sm:$0xff]
        %280 = vset.pattern.permute.xlu0 0
        %281 = vperm.xlu0 %280, %v275
        %v282 = vpop.permute.xlu0 %281
        %285 = vset.pattern.permute.xlu0 0
        %286 = vperm.xlu0 %285, %v276
        %v287 = vpop.permute.xlu0 %286
        %290 = vset.pattern.permute.xlu0 0
        %291 = vperm.xlu0 %290, %v277
        %v292 = vpop.permute.xlu0 %291
        %295 = vset.pattern.permute.xlu0 0
        %296 = vperm.xlu0 %295, %v278
        %v297 = vpop.permute.xlu0 %296
        %v299 = vperm.slane %v274, 0
        %v300 = vmul.f32 %v282, %v299
        %v301 = vmul.f32 %v287, %v299
        %v302 = vmul.f32 %v292, %v299
        %v303 = vmul.f32 %v297, %v299
        %304 = vset.pattern.permute.xlu0 1
        %305 = vperm.xlu0 %304, %v275
        %v306 = vpop.permute.xlu0 %305
        %308 = vset.pattern.permute.xlu0 1
        %309 = vperm.xlu0 %308, %v276
        %v310 = vpop.permute.xlu0 %309
        %312 = vset.pattern.permute.xlu0 1
        %313 = vperm.xlu0 %312, %v277
        %v314 = vpop.permute.xlu0 %313
        %316 = vset.pattern.permute.xlu0 1
        %317 = vperm.xlu0 %316, %v278
        %v318 = vpop.permute.xlu0 %317
        %v320 = vperm.slane %v274, 1
        %v321 = vmul.f32 %v306, %v320
        %v322 = vmul.f32 %v310, %v320
        %v323 = vmul.f32 %v314, %v320
        %v324 = vmul.f32 %v318, %v320
        %v325 = vadd.f32 %v300, %v321
        %v326 = vadd.f32 %v301, %v322
        %v327 = vadd.f32 %v302, %v323
        %v328 = vadd.f32 %v303, %v324
        %v329 = vld [vmem:[%s2] sm:$0xff]
        %v330 = vld [vmem:[%s2 + $0x8] sm:$0xff]
        %v331 = vld [vmem:[%s2 + $0x10] sm:$0xff]
        %v332 = vld [vmem:[%s2 + $0x18] sm:$0xff]
        %334 = vset.pattern.permute.xlu0 0
        %335 = vperm.xlu0 %334, %v329
        %v336 = vpop.permute.xlu0 %335
        %339 = vset.pattern.permute.xlu0 0
        %340 = vperm.xlu0 %339, %v330
        %v341 = vpop.permute.xlu0 %340
        %344 = vset.pattern.permute.xlu0 0
        %345 = vperm.xlu0 %344, %v331
        %v346 = vpop.permute.xlu0 %345
        %349 = vset.pattern.permute.xlu0 0
        %350 = vperm.xlu0 %349, %v332
        %v351 = vpop.permute.xlu0 %350
        %v353 = vadd.f32 %v325, %v336
        %v354 = vadd.f32 %v326, %v341
        %v355 = vadd.f32 %v327, %v346
        %v356 = vadd.f32 %v328, %v351
        %v357 = vtanh.pop %v353
        %v358 = vtanh.pop %v354
        %v359 = vtanh.pop %v355
        %v360 = vtanh.pop %v356
        %v361 = vld [vmem:[%s3] sm:$0xff]
        %v362 = vld [vmem:[%s3 + $0x8] sm:$0xff]
        %v363 = vld [vmem:[%s3 + $0x10] sm:$0xff]
        %v364 = vld [vmem:[%s3 + $0x18] sm:$0xff]
        %v365 = vld [vmem:[%s4] sm:$0xff]
        %v366 = vld [vmem:[%s4 + $0x8] sm:$0xff]
        %v367 = vld [vmem:[%s4 + $0x10] sm:$0xff]
        %v368 = vld [vmem:[%s4 + $0x18] sm:$0xff]
        %370 = vset.pattern.permute.xlu0 0
        %371 = vperm.xlu0 %370, %v365
        %v372 = vpop.permute.xlu0 %371
        %375 = vset.pattern.permute.xlu0 0
        %376 = vperm.xlu0 %375, %v366
        %v377 = vpop.permute.xlu0 %376
        %380 = vset.pattern.permute.xlu0 0
        %381 = vperm.xlu0 %380, %v367
        %v382 = vpop.permute.xlu0 %381
        %385 = vset.pattern.permute.xlu0 0
        %386 = vperm.xlu0 %385, %v368
        %v387 = vpop.permute.xlu0 %386
        %vm389 = vcmask 261120
        %v391 = vsel %vm389, %v361, 0
        %v394 = vsel %vm389, %v362, 0
        %v397 = vsel %vm389, %v363, 0
        %v400 = vsel %vm389, %v364, 0
        %402 = vmatpush.msra.mxu0 0.0
        %403 = vmatpush.msra.mxu0 0.0
        %404 = vmatpush.msra.mxu0 0.0
        %405 = vmatpush.msra.mxu0 0.0
        %406 = vmatpush.msra.mxu0 0.0
        %407 = vmatpush.msra.mxu0 0.0
        %408 = vmatpush.msra.mxu0 0.0
        %409 = vmatpush.msra.mxu0 0.0
        %410 = vmatpush.msra.mxu0 0.0
        %411 = vmatpush.msra.mxu0 0.0
        %412 = vmatpush.msra.mxu0 0.0
        %413 = vmatpush.msra.mxu0 0.0
        %414 = vmatpush.msra.mxu0 %v360
        %415 = vmatpush.msra.mxu0 %v359
        %416 = vmatpush.msra.mxu0 %v358
        %417 = vmatpush.msra.mxu0 %v357
        %418 = vmatmul.f32.gmra.mxu0 %v391
        %v419 = vpop.f32.mrf.mxu0
        %v420 = vadd.f32 %v372, %v419
        %421 = vmatmul.f32.gmra.mxu0 %v394
        %v422 = vpop.f32.mrf.mxu0
        %v423 = vadd.f32 %v377, %v422
        %424 = vmatmul.f32.gmra.mxu0 %v397
        %v425 = vpop.f32.mrf.mxu0
        %v426 = vadd.f32 %v382, %v425
        %427 = vmatmul.f32.gmra.mxu0 %v400
        %v428 = vpop.f32.mrf.mxu0
        %v429 = vadd.f32 %v387, %v428
        %430 = vdwg.mxu0
        %v431 = vtanh.pop %v420
        %v432 = vtanh.pop %v423
        %v433 = vtanh.pop %v426
        %v434 = vtanh.pop %v429
        %v435 = vld [vmem:[%s5] sm:$0xf]
        %v436 = vld [vmem:[%s6] sm:$0xf]
        %438 = vset.pattern.permute.xlu0 0
        %439 = vperm.xlu0 %438, %v436
        %v440 = vpop.permute.xlu0 %439
        %v443 = vsel %vm389, %v435, 0
        %445 = vmatpush.msra.mxu0 0.0
        %446 = vmatpush.msra.mxu0 0.0
        %447 = vmatpush.msra.mxu0 0.0
        %448 = vmatpush.msra.mxu0 0.0
        %449 = vmatpush.msra.mxu0 0.0
        %450 = vmatpush.msra.mxu0 0.0
        %451 = vmatpush.msra.mxu0 0.0
        %452 = vmatpush.msra.mxu0 0.0
        %453 = vmatpush.msra.mxu0 0.0
        %454 = vmatpush.msra.mxu0 0.0
        %455 = vmatpush.msra.mxu0 0.0
        %456 = vmatpush.msra.mxu0 0.0
        %457 = vmatpush.msra.mxu0 %v434
        %458 = vmatpush.msra.mxu0 %v433
        %459 = vmatpush.msra.mxu0 %v432
        %460 = vmatpush.msra.mxu0 %v431
        %461 = vmatmul.f32.gmra.mxu0 %v443
        %v462 = vpop.f32.mrf.mxu0
        %v463 = vadd.f32 %v440, %v462
        %464 = vdwg.mxu0
        %v465 = vmul.f32 %v463, 1.442695
        %v466 = vpow.pop %v465
        %v468 = vrot.slane %v466, 2
        %v470 = vmul.f32 %v274, %v468
        %v471 = vadd.f32 %v470, %v463
        %v472 = vadd.f32 %v463, 0.0
        %v474 = vrot.slane %v463, 1
        %v476 = vadd.f32 %v472, %v474
        %s477 = scalar_lea.vmem %s1, 32
        %v478 = vld [vmem:[%s477] sm:$0xff]
        %v479 = vld [vmem:[%s477 + $0x8] sm:$0xff]
        %v480 = vld [vmem:[%s477 + $0x10] sm:$0xff]
        %v481 = vld [vmem:[%s477 + $0x18] sm:$0xff]
        %483 = vset.pattern.permute.xlu0 0
        %484 = vperm.xlu0 %483, %v478
        %v485 = vpop.permute.xlu0 %484
        %488 = vset.pattern.permute.xlu0 0
        %489 = vperm.xlu0 %488, %v479
        %v490 = vpop.permute.xlu0 %489
        %493 = vset.pattern.permute.xlu0 0
        %494 = vperm.xlu0 %493, %v480
        %v495 = vpop.permute.xlu0 %494
        %498 = vset.pattern.permute.xlu0 0
        %499 = vperm.xlu0 %498, %v481
        %v500 = vpop.permute.xlu0 %499
        %v502 = vperm.slane %v471, 0
        %v503 = vmul.f32 %v485, %v502
        %v504 = vmul.f32 %v490, %v502
        %v505 = vmul.f32 %v495, %v502
        %v506 = vmul.f32 %v500, %v502
        %507 = vset.pattern.permute.xlu0 1
        %508 = vperm.xlu0 %507, %v478
        %v509 = vpop.permute.xlu0 %508
        %511 = vset.pattern.permute.xlu0 1
        %512 = vperm.xlu0 %511, %v479
        %v513 = vpop.permute.xlu0 %512
        %515 = vset.pattern.permute.xlu0 1
        %516 = vperm.xlu0 %515, %v480
        %v517 = vpop.permute.xlu0 %516
        %519 = vset.pattern.permute.xlu0 1
        %520 = vperm.xlu0 %519, %v481
        %v521 = vpop.permute.xlu0 %520
        %v523 = vperm.slane %v471, 1
        %v524 = vmul.f32 %v509, %v523
        %v525 = vmul.f32 %v513, %v523
        %v526 = vmul.f32 %v517, %v523
        %v527 = vmul.f32 %v521, %v523
        %v528 = vadd.f32 %v503, %v524
        %v529 = vadd.f32 %v504, %v525
        %v530 = vadd.f32 %v505, %v526
        %v531 = vadd.f32 %v506, %v527
        %s532 = scalar_lea.vmem %s2, 32
        %v533 = vld [vmem:[%s532] sm:$0xff]
        %v534 = vld [vmem:[%s532 + $0x8] sm:$0xff]
        %v535 = vld [vmem:[%s532 + $0x10] sm:$0xff]
        %v536 = vld [vmem:[%s532 + $0x18] sm:$0xff]
        %538 = vset.pattern.permute.xlu0 0
        %539 = vperm.xlu0 %538, %v533
        %v540 = vpop.permute.xlu0 %539
        %543 = vset.pattern.permute.xlu0 0
        %544 = vperm.xlu0 %543, %v534
        %v545 = vpop.permute.xlu0 %544
        %548 = vset.pattern.permute.xlu0 0
        %549 = vperm.xlu0 %548, %v535
        %v550 = vpop.permute.xlu0 %549
        %553 = vset.pattern.permute.xlu0 0
        %554 = vperm.xlu0 %553, %v536
        %v555 = vpop.permute.xlu0 %554
        %v557 = vadd.f32 %v528, %v540
        %v558 = vadd.f32 %v529, %v545
        %v559 = vadd.f32 %v530, %v550
        %v560 = vadd.f32 %v531, %v555
        %v561 = vtanh.pop %v557
        %v562 = vtanh.pop %v558
        %v563 = vtanh.pop %v559
        %v564 = vtanh.pop %v560
        %s565 = scalar_lea.vmem %s3, 32
        %v566 = vld [vmem:[%s565] sm:$0xff]
        %v567 = vld [vmem:[%s565 + $0x8] sm:$0xff]
        %v568 = vld [vmem:[%s565 + $0x10] sm:$0xff]
        %v569 = vld [vmem:[%s565 + $0x18] sm:$0xff]
        %s570 = scalar_lea.vmem %s4, 32
        %v571 = vld [vmem:[%s570] sm:$0xff]
        %v572 = vld [vmem:[%s570 + $0x8] sm:$0xff]
        %v573 = vld [vmem:[%s570 + $0x10] sm:$0xff]
        %v574 = vld [vmem:[%s570 + $0x18] sm:$0xff]
        %576 = vset.pattern.permute.xlu0 0
        %577 = vperm.xlu0 %576, %v571
        %v578 = vpop.permute.xlu0 %577
        %581 = vset.pattern.permute.xlu0 0
        %582 = vperm.xlu0 %581, %v572
        %v583 = vpop.permute.xlu0 %582
        %586 = vset.pattern.permute.xlu0 0
        %587 = vperm.xlu0 %586, %v573
        %v588 = vpop.permute.xlu0 %587
        %591 = vset.pattern.permute.xlu0 0
        %592 = vperm.xlu0 %591, %v574
        %v593 = vpop.permute.xlu0 %592
        %v596 = vsel %vm389, %v566, 0
        %v599 = vsel %vm389, %v567, 0
        %v602 = vsel %vm389, %v568, 0
        %v605 = vsel %vm389, %v569, 0
        %607 = vmatpush.msra.mxu0 0.0
        %608 = vmatpush.msra.mxu0 0.0
        %609 = vmatpush.msra.mxu0 0.0
        %610 = vmatpush.msra.mxu0 0.0
        %611 = vmatpush.msra.mxu0 0.0
        %612 = vmatpush.msra.mxu0 0.0
        %613 = vmatpush.msra.mxu0 0.0
        %614 = vmatpush.msra.mxu0 0.0
        %615 = vmatpush.msra.mxu0 0.0
        %616 = vmatpush.msra.mxu0 0.0
        %617 = vmatpush.msra.mxu0 0.0
        %618 = vmatpush.msra.mxu0 0.0
        %619 = vmatpush.msra.mxu0 %v564
        %620 = vmatpush.msra.mxu0 %v563
        %621 = vmatpush.msra.mxu0 %v562
        %622 = vmatpush.msra.mxu0 %v561
        %623 = vmatmul.f32.gmra.mxu0 %v596
        %v624 = vpop.f32.mrf.mxu0
        %v625 = vadd.f32 %v578, %v624
        %626 = vmatmul.f32.gmra.mxu0 %v599
        %v627 = vpop.f32.mrf.mxu0
        %v628 = vadd.f32 %v583, %v627
        %629 = vmatmul.f32.gmra.mxu0 %v602
        %v630 = vpop.f32.mrf.mxu0
        %v631 = vadd.f32 %v588, %v630
        %632 = vmatmul.f32.gmra.mxu0 %v605
        %v633 = vpop.f32.mrf.mxu0
        %v634 = vadd.f32 %v593, %v633
        %635 = vdwg.mxu0
        %v636 = vtanh.pop %v625
        %v637 = vtanh.pop %v628
        %v638 = vtanh.pop %v631
        %v639 = vtanh.pop %v634
        %s640 = scalar_lea.vmem %s5, 4
        %v641 = vld [vmem:[%s640] sm:$0xf]
        %s642 = scalar_lea.vmem %s6, 4
        %v643 = vld [vmem:[%s642] sm:$0xf]
        %645 = vset.pattern.permute.xlu0 0
        %646 = vperm.xlu0 %645, %v643
        %v647 = vpop.permute.xlu0 %646
        %v650 = vsel %vm389, %v641, 0
        %652 = vmatpush.msra.mxu0 0.0
        %653 = vmatpush.msra.mxu0 0.0
        %654 = vmatpush.msra.mxu0 0.0
        %655 = vmatpush.msra.mxu0 0.0
        %656 = vmatpush.msra.mxu0 0.0
        %657 = vmatpush.msra.mxu0 0.0
        %658 = vmatpush.msra.mxu0 0.0
        %659 = vmatpush.msra.mxu0 0.0
        %660 = vmatpush.msra.mxu0 0.0
        %661 = vmatpush.msra.mxu0 0.0
        %662 = vmatpush.msra.mxu0 0.0
        %663 = vmatpush.msra.mxu0 0.0
        %664 = vmatpush.msra.mxu0 %v639
        %665 = vmatpush.msra.mxu0 %v638
        %666 = vmatpush.msra.mxu0 %v637
        %667 = vmatpush.msra.mxu0 %v636
        %668 = vmatmul.f32.gmra.mxu0 %v650
        %v669 = vpop.f32.mrf.mxu0
        %v670 = vadd.f32 %v647, %v669
        %671 = vdwg.mxu0
        %v672 = vmul.f32 %v670, 1.442695
        %v673 = vpow.pop %v672
        %v675 = vrot.slane %v673, 2
        %v677 = vmul.f32 %v471, %v675
        %v678 = vadd.f32 %v677, %v670
        %v679 = vadd.f32 %v476, %v670
        %v681 = vrot.slane %v670, 1
        %v683 = vadd.f32 %v679, %v681
        %s684 = scalar_lea.vmem %s1, 64
        %v685 = vld [vmem:[%s684] sm:$0xff]
        %v686 = vld [vmem:[%s684 + $0x8] sm:$0xff]
        %v687 = vld [vmem:[%s684 + $0x10] sm:$0xff]
        %v688 = vld [vmem:[%s684 + $0x18] sm:$0xff]
        %690 = vset.pattern.permute.xlu0 0
        %691 = vperm.xlu0 %690, %v685
        %v692 = vpop.permute.xlu0 %691
        %695 = vset.pattern.permute.xlu0 0
        %696 = vperm.xlu0 %695, %v686
        %v697 = vpop.permute.xlu0 %696
        %700 = vset.pattern.permute.xlu0 0
        %701 = vperm.xlu0 %700, %v687
        %v702 = vpop.permute.xlu0 %701
        %705 = vset.pattern.permute.xlu0 0
        %706 = vperm.xlu0 %705, %v688
        %v707 = vpop.permute.xlu0 %706
        %v709 = vperm.slane %v678, 0
        %v710 = vmul.f32 %v692, %v709
        %v711 = vmul.f32 %v697, %v709
        %v712 = vmul.f32 %v702, %v709
        %v713 = vmul.f32 %v707, %v709
        %714 = vset.pattern.permute.xlu0 1
        %715 = vperm.xlu0 %714, %v685
        %v716 = vpop.permute.xlu0 %715
        %718 = vset.pattern.permute.xlu0 1
        %719 = vperm.xlu0 %718, %v686
        %v720 = vpop.permute.xlu0 %719
        %722 = vset.pattern.permute.xlu0 1
        %723 = vperm.xlu0 %722, %v687
        %v724 = vpop.permute.xlu0 %723
        %726 = vset.pattern.permute.xlu0 1
        %727 = vperm.xlu0 %726, %v688
        %v728 = vpop.permute.xlu0 %727
        %v730 = vperm.slane %v678, 1
        %v731 = vmul.f32 %v716, %v730
        %v732 = vmul.f32 %v720, %v730
        %v733 = vmul.f32 %v724, %v730
        %v734 = vmul.f32 %v728, %v730
        %v735 = vadd.f32 %v710, %v731
        %v736 = vadd.f32 %v711, %v732
        %v737 = vadd.f32 %v712, %v733
        %v738 = vadd.f32 %v713, %v734
        %s739 = scalar_lea.vmem %s2, 64
        %v740 = vld [vmem:[%s739] sm:$0xff]
        %v741 = vld [vmem:[%s739 + $0x8] sm:$0xff]
        %v742 = vld [vmem:[%s739 + $0x10] sm:$0xff]
        %v743 = vld [vmem:[%s739 + $0x18] sm:$0xff]
        %745 = vset.pattern.permute.xlu0 0
        %746 = vperm.xlu0 %745, %v740
        %v747 = vpop.permute.xlu0 %746
        %750 = vset.pattern.permute.xlu0 0
        %751 = vperm.xlu0 %750, %v741
        %v752 = vpop.permute.xlu0 %751
        %755 = vset.pattern.permute.xlu0 0
        %756 = vperm.xlu0 %755, %v742
        %v757 = vpop.permute.xlu0 %756
        %760 = vset.pattern.permute.xlu0 0
        %761 = vperm.xlu0 %760, %v743
        %v762 = vpop.permute.xlu0 %761
        %v764 = vadd.f32 %v735, %v747
        %v765 = vadd.f32 %v736, %v752
        %v766 = vadd.f32 %v737, %v757
        %v767 = vadd.f32 %v738, %v762
        %v768 = vtanh.pop %v764
        %v769 = vtanh.pop %v765
        %v770 = vtanh.pop %v766
        %v771 = vtanh.pop %v767
        %s772 = scalar_lea.vmem %s3, 64
        %v773 = vld [vmem:[%s772] sm:$0xff]
        %v774 = vld [vmem:[%s772 + $0x8] sm:$0xff]
        %v775 = vld [vmem:[%s772 + $0x10] sm:$0xff]
        %v776 = vld [vmem:[%s772 + $0x18] sm:$0xff]
        %s777 = scalar_lea.vmem %s4, 64
        %v778 = vld [vmem:[%s777] sm:$0xff]
        %v779 = vld [vmem:[%s777 + $0x8] sm:$0xff]
        %v780 = vld [vmem:[%s777 + $0x10] sm:$0xff]
        %v781 = vld [vmem:[%s777 + $0x18] sm:$0xff]
        %783 = vset.pattern.permute.xlu0 0
        %784 = vperm.xlu0 %783, %v778
        %v785 = vpop.permute.xlu0 %784
        %788 = vset.pattern.permute.xlu0 0
        %789 = vperm.xlu0 %788, %v779
        %v790 = vpop.permute.xlu0 %789
        %793 = vset.pattern.permute.xlu0 0
        %794 = vperm.xlu0 %793, %v780
        %v795 = vpop.permute.xlu0 %794
        %798 = vset.pattern.permute.xlu0 0
        %799 = vperm.xlu0 %798, %v781
        %v800 = vpop.permute.xlu0 %799
        %v803 = vsel %vm389, %v773, 0
        %v806 = vsel %vm389, %v774, 0
        %v809 = vsel %vm389, %v775, 0
        %v812 = vsel %vm389, %v776, 0
        %814 = vmatpush.msra.mxu0 0.0
        %815 = vmatpush.msra.mxu0 0.0
        %816 = vmatpush.msra.mxu0 0.0
        %817 = vmatpush.msra.mxu0 0.0
        %818 = vmatpush.msra.mxu0 0.0
        %819 = vmatpush.msra.mxu0 0.0
        %820 = vmatpush.msra.mxu0 0.0
        %821 = vmatpush.msra.mxu0 0.0
        %822 = vmatpush.msra.mxu0 0.0
        %823 = vmatpush.msra.mxu0 0.0
        %824 = vmatpush.msra.mxu0 0.0
        %825 = vmatpush.msra.mxu0 0.0
        %826 = vmatpush.msra.mxu0 %v771
        %827 = vmatpush.msra.mxu0 %v770
        %828 = vmatpush.msra.mxu0 %v769
        %829 = vmatpush.msra.mxu0 %v768
        %830 = vmatmul.f32.gmra.mxu0 %v803
        %v831 = vpop.f32.mrf.mxu0
        %v832 = vadd.f32 %v785, %v831
        %833 = vmatmul.f32.gmra.mxu0 %v806
        %v834 = vpop.f32.mrf.mxu0
        %v835 = vadd.f32 %v790, %v834
        %836 = vmatmul.f32.gmra.mxu0 %v809
        %v837 = vpop.f32.mrf.mxu0
        %v838 = vadd.f32 %v795, %v837
        %839 = vmatmul.f32.gmra.mxu0 %v812
        %v840 = vpop.f32.mrf.mxu0
        %v841 = vadd.f32 %v800, %v840
        %842 = vdwg.mxu0
        %v843 = vtanh.pop %v832
        %v844 = vtanh.pop %v835
        %v845 = vtanh.pop %v838
        %v846 = vtanh.pop %v841
        %s847 = scalar_lea.vmem %s5, 8
        %v848 = vld [vmem:[%s847] sm:$0xf]
        %s849 = scalar_lea.vmem %s6, 8
        %v850 = vld [vmem:[%s849] sm:$0xf]
        %852 = vset.pattern.permute.xlu0 0
        %853 = vperm.xlu0 %852, %v850
        %v854 = vpop.permute.xlu0 %853
        %v857 = vsel %vm389, %v848, 0
        %859 = vmatpush.msra.mxu0 0.0
        %860 = vmatpush.msra.mxu0 0.0
        %861 = vmatpush.msra.mxu0 0.0
        %862 = vmatpush.msra.mxu0 0.0
        %863 = vmatpush.msra.mxu0 0.0
        %864 = vmatpush.msra.mxu0 0.0
        %865 = vmatpush.msra.mxu0 0.0
        %866 = vmatpush.msra.mxu0 0.0
        %867 = vmatpush.msra.mxu0 0.0
        %868 = vmatpush.msra.mxu0 0.0
        %869 = vmatpush.msra.mxu0 0.0
        %870 = vmatpush.msra.mxu0 0.0
        %871 = vmatpush.msra.mxu0 %v846
        %872 = vmatpush.msra.mxu0 %v845
        %873 = vmatpush.msra.mxu0 %v844
        %874 = vmatpush.msra.mxu0 %v843
        %875 = vmatmul.f32.gmra.mxu0 %v857
        %v876 = vpop.f32.mrf.mxu0
        %v877 = vadd.f32 %v854, %v876
        %878 = vdwg.mxu0
        %v879 = vmul.f32 %v877, 1.442695
        %v880 = vpow.pop %v879
        %v882 = vrot.slane %v880, 2
        %v884 = vmul.f32 %v678, %v882
        %v885 = vadd.f32 %v884, %v877
        %v886 = vadd.f32 %v683, %v877
        %v888 = vrot.slane %v877, 1
        %v890 = vadd.f32 %v886, %v888
        %s891 = scalar_lea.vmem %s1, 96
        %v892 = vld [vmem:[%s891] sm:$0xff]
        %v893 = vld [vmem:[%s891 + $0x8] sm:$0xff]
        %v894 = vld [vmem:[%s891 + $0x10] sm:$0xff]
        %v895 = vld [vmem:[%s891 + $0x18] sm:$0xff]
        %897 = vset.pattern.permute.xlu0 0
        %898 = vperm.xlu0 %897, %v892
        %v899 = vpop.permute.xlu0 %898
        %902 = vset.pattern.permute.xlu0 0
        %903 = vperm.xlu0 %902, %v893
        %v904 = vpop.permute.xlu0 %903
        %907 = vset.pattern.permute.xlu0 0
        %908 = vperm.xlu0 %907, %v894
        %v909 = vpop.permute.xlu0 %908
        %912 = vset.pattern.permute.xlu0 0
        %913 = vperm.xlu0 %912, %v895
        %v914 = vpop.permute.xlu0 %913
        %v916 = vperm.slane %v885, 0
        %v917 = vmul.f32 %v899, %v916
        %v918 = vmul.f32 %v904, %v916
        %v919 = vmul.f32 %v909, %v916
        %v920 = vmul.f32 %v914, %v916
        %921 = vset.pattern.permute.xlu0 1
        %922 = vperm.xlu0 %921, %v892
        %v923 = vpop.permute.xlu0 %922
        %925 = vset.pattern.permute.xlu0 1
        %926 = vperm.xlu0 %925, %v893
        %v927 = vpop.permute.xlu0 %926
        %929 = vset.pattern.permute.xlu0 1
        %930 = vperm.xlu0 %929, %v894
        %v931 = vpop.permute.xlu0 %930
        %933 = vset.pattern.permute.xlu0 1
        %934 = vperm.xlu0 %933, %v895
        %v935 = vpop.permute.xlu0 %934
        %v937 = vperm.slane %v885, 1
        %v938 = vmul.f32 %v923, %v937
        %v939 = vmul.f32 %v927, %v937
        %v940 = vmul.f32 %v931, %v937
        %v941 = vmul.f32 %v935, %v937
        %v942 = vadd.f32 %v917, %v938
        %v943 = vadd.f32 %v918, %v939
        %v944 = vadd.f32 %v919, %v940
        %v945 = vadd.f32 %v920, %v941
        %s946 = scalar_lea.vmem %s2, 96
        %v947 = vld [vmem:[%s946] sm:$0xff]
        %v948 = vld [vmem:[%s946 + $0x8] sm:$0xff]
        %v949 = vld [vmem:[%s946 + $0x10] sm:$0xff]
        %v950 = vld [vmem:[%s946 + $0x18] sm:$0xff]
        %952 = vset.pattern.permute.xlu0 0
        %953 = vperm.xlu0 %952, %v947
        %v954 = vpop.permute.xlu0 %953
        %957 = vset.pattern.permute.xlu0 0
        %958 = vperm.xlu0 %957, %v948
        %v959 = vpop.permute.xlu0 %958
        %962 = vset.pattern.permute.xlu0 0
        %963 = vperm.xlu0 %962, %v949
        %v964 = vpop.permute.xlu0 %963
        %967 = vset.pattern.permute.xlu0 0
        %968 = vperm.xlu0 %967, %v950
        %v969 = vpop.permute.xlu0 %968
        %v971 = vadd.f32 %v942, %v954
        %v972 = vadd.f32 %v943, %v959
        %v973 = vadd.f32 %v944, %v964
        %v974 = vadd.f32 %v945, %v969
        %v975 = vtanh.pop %v971
        %v976 = vtanh.pop %v972
        %v977 = vtanh.pop %v973
        %v978 = vtanh.pop %v974
        %s979 = scalar_lea.vmem %s3, 96
        %v980 = vld [vmem:[%s979] sm:$0xff]
        %v981 = vld [vmem:[%s979 + $0x8] sm:$0xff]
        %v982 = vld [vmem:[%s979 + $0x10] sm:$0xff]
        %v983 = vld [vmem:[%s979 + $0x18] sm:$0xff]
        %s984 = scalar_lea.vmem %s4, 96
        %v985 = vld [vmem:[%s984] sm:$0xff]
        %v986 = vld [vmem:[%s984 + $0x8] sm:$0xff]
        %v987 = vld [vmem:[%s984 + $0x10] sm:$0xff]
        %v988 = vld [vmem:[%s984 + $0x18] sm:$0xff]
        %990 = vset.pattern.permute.xlu0 0
        %991 = vperm.xlu0 %990, %v985
        %v992 = vpop.permute.xlu0 %991
        %995 = vset.pattern.permute.xlu0 0
        %996 = vperm.xlu0 %995, %v986
        %v997 = vpop.permute.xlu0 %996
        %1000 = vset.pattern.permute.xlu0 0
        %1001 = vperm.xlu0 %1000, %v987
        %v1002 = vpop.permute.xlu0 %1001
        %1005 = vset.pattern.permute.xlu0 0
        %1006 = vperm.xlu0 %1005, %v988
        %v1007 = vpop.permute.xlu0 %1006
        %v1010 = vsel %vm389, %v980, 0
        %v1013 = vsel %vm389, %v981, 0
        %v1016 = vsel %vm389, %v982, 0
        %v1019 = vsel %vm389, %v983, 0
        %1021 = vmatpush.msra.mxu0 0.0
        %1022 = vmatpush.msra.mxu0 0.0
        %1023 = vmatpush.msra.mxu0 0.0
        %1024 = vmatpush.msra.mxu0 0.0
        %1025 = vmatpush.msra.mxu0 0.0
        %1026 = vmatpush.msra.mxu0 0.0
        %1027 = vmatpush.msra.mxu0 0.0
        %1028 = vmatpush.msra.mxu0 0.0
        %1029 = vmatpush.msra.mxu0 0.0
        %1030 = vmatpush.msra.mxu0 0.0
        %1031 = vmatpush.msra.mxu0 0.0
        %1032 = vmatpush.msra.mxu0 0.0
        %1033 = vmatpush.msra.mxu0 %v978
        %1034 = vmatpush.msra.mxu0 %v977
        %1035 = vmatpush.msra.mxu0 %v976
        %1036 = vmatpush.msra.mxu0 %v975
        %1037 = vmatmul.f32.gmra.mxu0 %v1010
        %v1038 = vpop.f32.mrf.mxu0
        %v1039 = vadd.f32 %v992, %v1038
        %1040 = vmatmul.f32.gmra.mxu0 %v1013
        %v1041 = vpop.f32.mrf.mxu0
        %v1042 = vadd.f32 %v997, %v1041
        %1043 = vmatmul.f32.gmra.mxu0 %v1016
        %v1044 = vpop.f32.mrf.mxu0
        %v1045 = vadd.f32 %v1002, %v1044
        %1046 = vmatmul.f32.gmra.mxu0 %v1019
        %v1047 = vpop.f32.mrf.mxu0
        %v1048 = vadd.f32 %v1007, %v1047
        %1049 = vdwg.mxu0
        %v1050 = vtanh.pop %v1039
        %v1051 = vtanh.pop %v1042
        %v1052 = vtanh.pop %v1045
        %v1053 = vtanh.pop %v1048
        %s1054 = scalar_lea.vmem %s5, 12
        %v1055 = vld [vmem:[%s1054] sm:$0xf]
        %s1056 = scalar_lea.vmem %s6, 12
        %v1057 = vld [vmem:[%s1056] sm:$0xf]
        %1059 = vset.pattern.permute.xlu0 0
        %1060 = vperm.xlu0 %1059, %v1057
        %v1061 = vpop.permute.xlu0 %1060
        %v1064 = vsel %vm389, %v1055, 0
        %1066 = vmatpush.msra.mxu0 0.0
        %1067 = vmatpush.msra.mxu0 0.0
        %1068 = vmatpush.msra.mxu0 0.0
        %1069 = vmatpush.msra.mxu0 0.0
        %1070 = vmatpush.msra.mxu0 0.0
        %1071 = vmatpush.msra.mxu0 0.0
        %1072 = vmatpush.msra.mxu0 0.0
        %1073 = vmatpush.msra.mxu0 0.0
        %1074 = vmatpush.msra.mxu0 0.0
        %1075 = vmatpush.msra.mxu0 0.0
        %1076 = vmatpush.msra.mxu0 0.0
        %1077 = vmatpush.msra.mxu0 0.0
        %1078 = vmatpush.msra.mxu0 %v1053
        %1079 = vmatpush.msra.mxu0 %v1052
        %1080 = vmatpush.msra.mxu0 %v1051
        %1081 = vmatpush.msra.mxu0 %v1050
        %1082 = vmatmul.f32.gmra.mxu0 %v1064
        %v1083 = vpop.f32.mrf.mxu0
        %v1084 = vadd.f32 %v1061, %v1083
        %1085 = vdwg.mxu0
        %v1086 = vmul.f32 %v1084, 1.442695
        %v1087 = vpow.pop %v1086
        %v1089 = vrot.slane %v1087, 2
        %v1091 = vmul.f32 %v885, %v1089
        %v1092 = vadd.f32 %v1091, %v1084
        %v1093 = vadd.f32 %v890, %v1084
        %v1095 = vrot.slane %v1084, 1
        %v1097 = vadd.f32 %v1093, %v1095
        %1098 = vst [vmem:[%s269] sm:$0x3] %v1092
        %1099 = vst [vmem:[%s269] sm:$0x4] %v1097
        %s1100 = sand.u32 %s181, 1
        %s1101 = scalar_lea.sflag [#allocation3], %s1100
        %s1102 = sand.u32 %s181, 1
        %s1103 = smul.addr %s1102, 4
        %s1104 = scalar_lea.vmem [#allocation2], %s1103
        // Predicated region
        $region49: #{tpu_custom_call.1} parent=47 // pred_check
          %p1105 = pneg %p191
        $region50: #{tpu_custom_call.1} parent=47 // pred_check_branch
          %1107 = sbr.rel (%p1105) target = $region52
        $region51: #{tpu_custom_call.1} parent=47 // pred_region
          %1109 = vsyncadd %s1101, 0
          %s1110 = smul.addr %s21, 4
          %s1111 = scalar_lea.hbm %s7, %s1110
          %s1113 = sshll.u32 %s1104, 4
          %s1114 = int_to_ptr.vmem [resolvable:$true] %s1113
          %s1115 = sshll.u32 %s1111, 4
          %s1116 = int_to_ptr.hbm [resolvable:$true] %s1115
          %1118 = dma.vmem_to_hbm [thread:$0]  %s1114, 64, %s1116, %s1101
        $region52: #{tpu_custom_call.1} parent=47 // pred_fallthru
          _
      $region48: #{tpu_custom_call.1} parent=5 // pred_fallthru
        _
      %p1119 = scmp.le.s32.totalorder 2, %s16
      // Predicated region
      $region53: #{tpu_custom_call.1} parent=5 // pred_check
        %p1120 = pneg %p1119
      $region54: #{tpu_custom_call.1} parent=5 // pred_check_branch
        %1122 = sbr.rel (%p1120) target = $region56
      $region55: #{tpu_custom_call.1} parent=5 // pred_region
        %s1123 = ssub.s32 %s16, 2
        // Predicated region
        $region57: #{tpu_custom_call.1} parent=55 // pred_check
          %p1124 = pneg %p197
        $region58: #{tpu_custom_call.1} parent=55 // pred_check_branch
          %1126 = sbr.rel (%p1124) target = $region60
        $region59: #{tpu_custom_call.1} parent=55 // pred_region
          %s1127 = sand.u32 %s182, 1
          %s1128 = scalar_lea.sflag [#allocation3], %s1127
          %s1129 = sand.u32 %s182, 1
          %s1130 = smul.addr %s1129, 4
          %s1131 = scalar_lea.vmem [#allocation2], %s1130
          %1133 = dma.done %s1128, 64
        $region60: #{tpu_custom_call.1} parent=55 // pred_fallthru
          _
      $region56: #{tpu_custom_call.1} parent=5 // pred_fallthru
        _
    $region6: #{tpu_custom_call.1} parent=1 // loop_footer
      %s20 = sadd.s32 1, %s16
    $region7: #{tpu_custom_call.1} parent=1 // loop_footer_branch
      %15 = sbr.rel target = $region3
    $region8: #{tpu_custom_call.1} parent=1 // loop_exit
      _
    %1134 = vsyncpa [#allocation3], 1
    %s1135 = scalar_lea.sflag [#allocation3], 1
    %1136 = vsyncpa %s1135, 1

</llo_original>
